<compile_context>
chip_gen: v7x
topology: tpu7x:2x2x1
jax: 0.10.0
libtpu: 0.0.40
codegen_flags: <defaults>
</compile_context>

<pallas_src>
import jax
import jax.numpy as jnp
from jax.experimental import pallas as pl
from jax.experimental.pallas import tpu as pltpu

INPUT_DIM = 13    # wine dataset has 13 features
OUTPUT_DIM = 3    # 3 wine classes
H1, H2, H3 = 64, 32, 16
NUM_LAYERS = 4
PAD = 128         # hidden/contraction dims padded to one MXU tile
OUT_PAD = 8       # output slab lanes (>= OUTPUT_DIM, one sublane-row worth)


def _round_up(n, m):
    return ((n + m - 1) // m) * m


def _pick_tile_b(b_pad, cap):
    """Largest multiple of 8 that divides b_pad and is <= cap."""
    tile = min(b_pad, max(8, cap))
    tile -= tile % 8
    tile = max(tile, 8)
    while b_pad % tile:
        tile -= 8
    return tile


def mlp_kernel(x_ref, w_ref, b_ref, o_ref, xpad_ref):
    # x_ref   : [TILE_B, 13]        real (un-inflated) features
    # w_ref   : [4, 128, 128]       packed zero-padded weights, layout [in, out]
    # b_ref   : [4, 128]            packed zero-padded biases
    # o_ref   : [TILE_B, OUT_PAD]   narrow output slab
    # xpad_ref: [TILE_B, 128]       VMEM scratch for lane-padding x
    #
    # Lane-pad the 13 features to 128 in VMEM; padded lanes are exactly 0 and
    # the matching packed-weight rows are 0, so the math is unchanged.
    xpad_ref[...] = jnp.zeros_like(xpad_ref)
    xpad_ref[:, :INPUT_DIM] = x_ref[...]
    h = xpad_ref[...]

    # three hidden layers + ReLU (padded lanes stay exactly 0 through ReLU)
    for i in range(NUM_LAYERS - 1):
        h = jnp.dot(h, w_ref[i], preferred_element_type=jnp.float32)
        h = jnp.maximum(h + b_ref[i], 0.0)

    # final linear
    logits = jnp.dot(h, w_ref[NUM_LAYERS - 1],
                     preferred_element_type=jnp.float32)
    logits = logits + b_ref[NUM_LAYERS - 1]

    # keep only the first OUT_PAD lanes; mask lanes >= OUTPUT_DIM to -inf so
    # they contribute 0 to the softmax denominator.
    logits = logits[:, :OUT_PAD]
    col = jax.lax.broadcasted_iota(jnp.int32, logits.shape, 1)
    logits = jnp.where(col < OUTPUT_DIM, logits, -jnp.inf)

    # softmax over last dim (nn.Softmax() on 2-D input == dim=1)
    m = jnp.max(logits, axis=-1, keepdims=True)
    e = jnp.exp(logits - m)
    s = jnp.sum(e, axis=-1, keepdims=True)
    # exact normalization (approx reciprocal made row-sums drift ~1e-3)
    o_ref[...] = e / s


def pack_params(params):
    """Pack 4 (w, b) pairs into one [4,128,128] weight slab + [4,128] bias slab."""
    w_packed = jnp.zeros((NUM_LAYERS, PAD, PAD), jnp.float32)
    b_packed = jnp.zeros((NUM_LAYERS, PAD), jnp.float32)
    for i, (w, b) in enumerate(params):
        fi, fo = w.shape
        w_packed = w_packed.at[i, :fi, :fo].set(w)
        b_packed = b_packed.at[i, :fo].set(b.reshape(-1))
    return w_packed, b_packed


def mlp_forward(x, w_packed, b_packed, tile_b=None):
    B, F = x.shape
    assert F == INPUT_DIM
    B_pad = _round_up(B, 8)
    if tile_b is None:
        cap = 1024
        if B_pad >= 256:
            # keep >= 2 grid steps so v7x can shard the batch over both TCs
            cap = min(cap, B_pad // 2)
        tile_b = _pick_tile_b(B_pad, cap)
    assert B_pad % tile_b == 0

    x = x.astype(jnp.float32)
    if B_pad != B:
        # only row padding (13 lanes wide) — no 128-lane inflated copy in HBM
        x_in = jnp.zeros((B_pad, F), jnp.float32).at[:B].set(x)
    else:
        x_in = x

    out = pl.pallas_call(
        mlp_kernel,
        out_shape=jax.ShapeDtypeStruct((B_pad, OUT_PAD), jnp.float32),
        grid=(B_pad // tile_b,),
        in_specs=[
            # real 13-lane feature block (last dim == full array dim -> legal)
            pl.BlockSpec((tile_b, INPUT_DIM), lambda i: (i, 0)),
            # constant-indexed -> weights/biases stay VMEM-resident across tiles
            pl.BlockSpec((NUM_LAYERS, PAD, PAD), lambda i: (0, 0, 0)),
            pl.BlockSpec((NUM_LAYERS, PAD), lambda i: (0, 0)),
        ],
        out_specs=pl.BlockSpec((tile_b, OUT_PAD), lambda i: (i, 0)),
        scratch_shapes=[pltpu.VMEM((tile_b, PAD), jnp.float32)],
        compiler_params=pltpu.CompilerParams(
            dimension_semantics=("parallel",)),
    )(x_in, w_packed, b_packed)
    return out[:B, :OUTPUT_DIM]


def init_linear(key, fan_in, fan_out):
    # Deterministic init mimicking nn.Linear's uniform(-1/sqrt(fan_in), ...).
    kw, kb = jax.random.split(key)
    bound = 1.0 / jnp.sqrt(fan_in)
    w = jax.random.uniform(kw, (fan_in, fan_out), jnp.float32, -bound, bound)
    b = jax.random.uniform(kb, (fan_out,), jnp.float32, -bound, bound)
    return w, b


def reference(x, params):
    h = x
    for i, (w, b) in enumerate(params):
        h = jnp.dot(h, w, precision=jax.lax.Precision.HIGHEST) + b
        if i < len(params) - 1:
            h = jnp.maximum(h, 0.0)
    return jax.nn.softmax(h, axis=-1)


def _check(x, params, w_packed, b_packed):
    out = jax.block_until_ready(mlp_forward(x, w_packed, b_packed))
    ref = reference(x, params)
    assert out.shape == (x.shape[0], OUTPUT_DIM)
    # tolerance allows for MXU default-precision (bf16-pass) f32 matmuls in
    # the kernel vs the HIGHEST-precision reference
    assert jnp.allclose(out, ref, atol=5e-3, rtol=5e-3), (
        f"max abs err {jnp.max(jnp.abs(out - ref))}")
    # exact normalization -> rows sum to 1 up to float rounding
    assert jnp.allclose(jnp.sum(out, axis=-1), 1.0, atol=1e-3)


if __name__ == "__main__":
    key = jax.random.PRNGKey(0)
    kx, kx2, k1, k2, k3, k4 = jax.random.split(key, 6)

    params = (
        init_linear(k1, INPUT_DIM, H1),
        init_linear(k2, H1, H2),
        init_linear(k3, H2, H3),
        init_linear(k4, H3, OUTPUT_DIM),
    )
    w_packed, b_packed = pack_params(params)

    # small batch, no padding needed
    x8 = jax.random.normal(kx, (8, INPUT_DIM), jnp.float32)
    _check(x8, params, w_packed, b_packed)

    # batch that exercises the row-padding path (B=20 -> B_pad=24)
    x20 = jax.random.normal(kx2, (20, INPUT_DIM), jnp.float32)
    _check(x20, params, w_packed, b_packed)

    print("KERNEL_OK")
</pallas_src>

<mosaic_0001>
module attributes {stable_mosaic.version = 11 : i64} {
  func.func @mlp_kernel(%arg0: i32, %arg1: memref<8x13xf32, #tpu.memory_space<vmem>>, %arg2: memref<4x128x128xf32, #tpu.memory_space<vmem>>, %arg3: memref<4x128xf32, #tpu.memory_space<vmem>>, %arg4: memref<8x8xf32, #tpu.memory_space<vmem>>, %arg5: memref<8x128xf32, #tpu.memory_space<vmem>>) attributes {dimension_semantics = [#tpu.dimension_semantics<parallel>], iteration_bounds = array<i64: 1>, scalar_prefetch = 0 : i64, scratch_operands = 1 : i64, tpu.core_type = #tpu.core_type<tc>, window_params = [{transform_indices = @transform_0, window_bounds = array<i64: 8, 13>}, {pipeline_mode = #tpu.pipeline_mode<synchronous>, transform_indices = @transform_1, window_bounds = array<i64: 4, 128, 128>}, {pipeline_mode = #tpu.pipeline_mode<synchronous>, transform_indices = @transform_2, window_bounds = array<i64: 4, 128>}, {transform_indices = @transform_3, window_bounds = array<i64: 8, 8>}]} {
    %cst = arith.constant 0.000000e+00 : f32
    %0 = vector.broadcast %cst : f32 to vector<8x128xf32>
    %c0 = arith.constant 0 : index
    %c0_0 = arith.constant 0 : index
    %1 = vector.load %arg5[%c0, %c0_0] : memref<8x128xf32, #tpu.memory_space<vmem>>, vector<8x128xf32>
    tpu.vector_store %arg5[%c0, %c0_0], %0 {strides = array<i32>} : memref<8x128xf32, #tpu.memory_space<vmem>>, vector<8x128xf32>,
    %c0_1 = arith.constant 0 : index
    %c0_2 = arith.constant 0 : index
    %2 = vector.load %arg1[%c0_1, %c0_2] : memref<8x13xf32, #tpu.memory_space<vmem>>, vector<8x13xf32>
    %c0_3 = arith.constant 0 : index
    %c0_4 = arith.constant 0 : index
    %3 = vector.load %arg5[%c0_3, %c0_4] : memref<8x128xf32, #tpu.memory_space<vmem>>, vector<8x13xf32>
    tpu.vector_store %arg5[%c0_3, %c0_4], %2 {strides = array<i32>} : memref<8x128xf32, #tpu.memory_space<vmem>>, vector<8x13xf32>,
    %c0_5 = arith.constant 0 : index
    %c0_6 = arith.constant 0 : index
    %4 = vector.load %arg5[%c0_5, %c0_6] : memref<8x128xf32, #tpu.memory_space<vmem>>, vector<8x128xf32>
    %c0_7 = arith.constant 0 : index
    %c0_8 = arith.constant 0 : index
    %c0_9 = arith.constant 0 : index
    %5 = vector.load %arg2[%c0_7, %c0_8, %c0_9] : memref<4x128x128xf32, #tpu.memory_space<vmem>>, vector<1x128x128xf32>
    %6 = vector.shape_cast %5 : vector<1x128x128xf32> to vector<128x128xf32>
    %cst_10 = arith.constant dense<0.000000e+00> : vector<8x128xf32>
    %7 = tpu.matmul %4, %6, %cst_10 {dimension_numbers = #tpu.dot_dimension_numbers<[1], [0], [0], [1], [0, 0, 1, 1], [], []>} : vector<8x128xf32>, vector<128x128xf32>, vector<8x128xf32> -> vector<8x128xf32>
    %c0_11 = arith.constant 0 : index
    %c0_12 = arith.constant 0 : index
    %8 = vector.load %arg3[%c0_11, %c0_12] : memref<4x128xf32, #tpu.memory_space<vmem>>, vector<1x128xf32>
    %9 = vector.shape_cast %8 : vector<1x128xf32> to vector<128xf32>
    %10 = vector.shape_cast %9 : vector<128xf32> to vector<1x128xf32>
    %11 = vector.broadcast %10 : vector<1x128xf32> to vector<8x128xf32>
    %12 = arith.addf %7, %11 : vector<8x128xf32>
    %cst_13 = arith.constant 0.000000e+00 : f32
    %13 = vector.broadcast %cst_13 : f32 to vector<8x128xf32>
    %14 = arith.maximumf %12, %13 : vector<8x128xf32>
    %c1 = arith.constant 1 : index
    %c0_14 = arith.constant 0 : index
    %c0_15 = arith.constant 0 : index
    %15 = vector.load %arg2[%c1, %c0_14, %c0_15] : memref<4x128x128xf32, #tpu.memory_space<vmem>>, vector<1x128x128xf32>
    %16 = vector.shape_cast %15 : vector<1x128x128xf32> to vector<128x128xf32>
    %cst_16 = arith.constant dense<0.000000e+00> : vector<8x128xf32>
    %17 = tpu.matmul %14, %16, %cst_16 {dimension_numbers = #tpu.dot_dimension_numbers<[1], [0], [0], [1], [0, 0, 1, 1], [], []>} : vector<8x128xf32>, vector<128x128xf32>, vector<8x128xf32> -> vector<8x128xf32>
    %c1_17 = arith.constant 1 : index
    %c0_18 = arith.constant 0 : index
    %18 = vector.load %arg3[%c1_17, %c0_18] : memref<4x128xf32, #tpu.memory_space<vmem>>, vector<1x128xf32>
    %19 = vector.shape_cast %18 : vector<1x128xf32> to vector<128xf32>
    %20 = vector.shape_cast %19 : vector<128xf32> to vector<1x128xf32>
    %21 = vector.broadcast %20 : vector<1x128xf32> to vector<8x128xf32>
    %22 = arith.addf %17, %21 : vector<8x128xf32>
    %cst_19 = arith.constant 0.000000e+00 : f32
    %23 = vector.broadcast %cst_19 : f32 to vector<8x128xf32>
    %24 = arith.maximumf %22, %23 : vector<8x128xf32>
    %c2 = arith.constant 2 : index
    %c0_20 = arith.constant 0 : index
    %c0_21 = arith.constant 0 : index
    %25 = vector.load %arg2[%c2, %c0_20, %c0_21] : memref<4x128x128xf32, #tpu.memory_space<vmem>>, vector<1x128x128xf32>
    %26 = vector.shape_cast %25 : vector<1x128x128xf32> to vector<128x128xf32>
    %cst_22 = arith.constant dense<0.000000e+00> : vector<8x128xf32>
    %27 = tpu.matmul %24, %26, %cst_22 {dimension_numbers = #tpu.dot_dimension_numbers<[1], [0], [0], [1], [0, 0, 1, 1], [], []>} : vector<8x128xf32>, vector<128x128xf32>, vector<8x128xf32> -> vector<8x128xf32>
    %c2_23 = arith.constant 2 : index
    %c0_24 = arith.constant 0 : index
    %28 = vector.load %arg3[%c2_23, %c0_24] : memref<4x128xf32, #tpu.memory_space<vmem>>, vector<1x128xf32>
    %29 = vector.shape_cast %28 : vector<1x128xf32> to vector<128xf32>
    %30 = vector.shape_cast %29 : vector<128xf32> to vector<1x128xf32>
    %31 = vector.broadcast %30 : vector<1x128xf32> to vector<8x128xf32>
    %32 = arith.addf %27, %31 : vector<8x128xf32>
    %cst_25 = arith.constant 0.000000e+00 : f32
    %33 = vector.broadcast %cst_25 : f32 to vector<8x128xf32>
    %34 = arith.maximumf %32, %33 : vector<8x128xf32>
    %c3 = arith.constant 3 : index
    %c0_26 = arith.constant 0 : index
    %c0_27 = arith.constant 0 : index
    %35 = vector.load %arg2[%c3, %c0_26, %c0_27] : memref<4x128x128xf32, #tpu.memory_space<vmem>>, vector<1x128x128xf32>
    %36 = vector.shape_cast %35 : vector<1x128x128xf32> to vector<128x128xf32>
    %cst_28 = arith.constant dense<0.000000e+00> : vector<8x128xf32>
    %37 = tpu.matmul %34, %36, %cst_28 {dimension_numbers = #tpu.dot_dimension_numbers<[1], [0], [0], [1], [0, 0, 1, 1], [], []>} : vector<8x128xf32>, vector<128x128xf32>, vector<8x128xf32> -> vector<8x128xf32>
    %c3_29 = arith.constant 3 : index
    %c0_30 = arith.constant 0 : index
    %38 = vector.load %arg3[%c3_29, %c0_30] : memref<4x128xf32, #tpu.memory_space<vmem>>, vector<1x128xf32>
    %39 = vector.shape_cast %38 : vector<1x128xf32> to vector<128xf32>
    %40 = vector.shape_cast %39 : vector<128xf32> to vector<1x128xf32>
    %41 = vector.broadcast %40 : vector<1x128xf32> to vector<8x128xf32>
    %42 = arith.addf %37, %41 : vector<8x128xf32>
    %43 = vector.extract_strided_slice %42 {offsets = [0, 0], sizes = [8, 8], strides = [1, 1]} : vector<8x128xf32> to vector<8x8xf32>
    %44 = tpu.iota {dimensions = array<i32: 1>} : vector<8x8xi32>
    %c3_i32 = arith.constant 3 : i32
    %45 = vector.broadcast %c3_i32 : i32 to vector<8x8xi32>
    %46 = arith.cmpi slt, %44, %45 : vector<8x8xi32>
    %cst_31 = arith.constant 0xFF800000 : f32
    %47 = vector.broadcast %cst_31 : f32 to vector<8x8xf32>
    %48 = arith.select %46, %43, %47 : vector<8x8xi1>, vector<8x8xf32>
    %cst_32 = arith.constant dense<0xFF800000> : vector<8xf32>
    %49 = vector.multi_reduction <maximumf>, %48, %cst_32 [1] : vector<8x8xf32> to vector<8xf32>
    %50 = vector.shape_cast %49 : vector<8xf32> to vector<8x1xf32>
    %51 = vector.broadcast %50 : vector<8x1xf32> to vector<8x8xf32>
    %52 = arith.subf %48, %51 : vector<8x8xf32>
    %53 = math.exp %52 : vector<8x8xf32>
    %cst_33 = arith.constant dense<0.000000e+00> : vector<8xf32>
    %54 = vector.multi_reduction <add>, %53, %cst_33 [1] : vector<8x8xf32> to vector<8xf32>
    %55 = vector.shape_cast %54 : vector<8xf32> to vector<8x1xf32>
    %56 = vector.broadcast %55 : vector<8x1xf32> to vector<8x8xf32>
    %57 = arith.divf %53, %56 : vector<8x8xf32>
    %c0_34 = arith.constant 0 : index
    %c0_35 = arith.constant 0 : index
    %58 = vector.load %arg4[%c0_34, %c0_35] : memref<8x8xf32, #tpu.memory_space<vmem>>, vector<8x8xf32>
    tpu.vector_store %arg4[%c0_34, %c0_35], %57 {strides = array<i32>} : memref<8x8xf32, #tpu.memory_space<vmem>>, vector<8x8xf32>,
    return
  }
  func.func @transform_0(%arg0: i32) -> (i32, i32) {
    %c0_i32 = arith.constant 0 : i32
    %c0_i32_0 = arith.constant 0 : i32
    return %arg0, %c0_i32 : i32, i32
  }
  func.func @transform_1(%arg0: i32) -> (i32, i32, i32) {
    %c0_i32 = arith.constant 0 : i32
    %c0_i32_0 = arith.constant 0 : i32
    %c0_i32_1 = arith.constant 0 : i32
    %c0_i32_2 = arith.constant 0 : i32
    return %c0_i32, %c0_i32_0, %c0_i32_1 : i32, i32, i32
  }
  func.func @transform_2(%arg0: i32) -> (i32, i32) {
    %c0_i32 = arith.constant 0 : i32
    %c0_i32_0 = arith.constant 0 : i32
    %c0_i32_1 = arith.constant 0 : i32
    return %c0_i32, %c0_i32_0 : i32, i32
  }
  func.func @transform_3(%arg0: i32) -> (i32, i32) {
    %c0_i32 = arith.constant 0 : i32
    %c0_i32_0 = arith.constant 0 : i32
    return %arg0, %c0_i32 : i32, i32
  }
}

</mosaic_0001>

<llo_original>
// kernel: tpu_custom_call.1
$region0: #{tpu_custom_call.1}
  #allocation0 [shape = 'u32[]', space=smem, size = 0x4, offset = 0x4, fixed_abs, tag = 'smem constant byte address 0x4 - core index']
  #allocation1 [shape = 'u32[144,128]{1,0:T(1,128)}', space=vmem, size = 0x12000, scoped, tag = 'internal scratch']
  #allocation2 [shape = 'f32[8,128]{1,0:T(8,128)}', space=vmem, size = 0x1000, scoped, tag = 'scratch operand']
  %s0 = inlined_call_operand.hbm [shape: f32[8,13], index: 0, kind: input, shape index: {}]
  %s1 = inlined_call_operand.hbm [shape: f32[4,128,128], index: 1, kind: input, shape index: {}]
  %s2 = inlined_call_operand.vmem [shape: f32[4,128], index: 2, kind: input, shape index: {}]
  %s3 = inlined_call_operand.hbm [shape: f32[8,8], index: 3, kind: output, shape index: {}]
  %s4 = sld [smem:[#allocation0]]
  $region30: #{tpu_custom_call.1} parent=0
    _
  %s6 = ssub.s32 1, %s4
  %s7 = scalar_select 0, %s6, %s4
  $region1: #{tpu_custom_call.1} parent=0
    #allocation3 [shape = 'u8[4096]{0}', space=vmem, size = 0x1000, scoped, tag = 'input window, operand 0, single buffered']
    #allocation4 [shape = 's32[1]{0}', space=sflag, size = 0x4, scoped, tag = 'scoped memory for tpu_custom_call.1']
    #allocation5 [shape = 's32[1]{0}', space=sflag, size = 0x4, scoped, tag = 'scoped memory for tpu_custom_call.1']
    #allocation6 [shape = 'u8[262144]{0}', space=vmem, size = 0x40000, scoped, tag = 'input window, operand 1, single buffered']
    #allocation7 [shape = 's32[1]{0}', space=sflag, size = 0x4, scoped, tag = 'scoped memory for tpu_custom_call.1']
    #allocation8 [shape = 'u8[4096]{0}', space=vmem, size = 0x1000, scoped, tag = 'output window, operand 0, single buffered']
    %8 = vsyncpa [#allocation4], 0
    %9 = vsyncpa [#allocation7], 0
    %10 = vsyncpa [#allocation5], 0
    // Predicated region
    $region2: #{tpu_custom_call.1} parent=1 // pred_check
      _
    $region3: #{tpu_custom_call.1} parent=1 // pred_check_branch
      %12 = sbr.rel (0) target = $region5
    $region4: #{tpu_custom_call.1} parent=1 // pred_region
      %s14 = ssub.s32 128, 128
      %15 = vsyncadd [#allocation4], %s14
      %s17 = sshll.u32 [#allocation3], 4
      %s18 = int_to_ptr.vmem [resolvable:$true] %s17
      %20 = dma.hbm_to_vmem [thread:$0]  %s0, 128, %s18, [#allocation4]
    $region5: #{tpu_custom_call.1} parent=1 // pred_fallthru
      _
    // Predicated region
    $region6: #{tpu_custom_call.1} parent=1 // pred_check
      _
    $region7: #{tpu_custom_call.1} parent=1 // pred_check_branch
      %22 = sbr.rel (0) target = $region9
    $region8: #{tpu_custom_call.1} parent=1 // pred_region
      %s24 = ssub.s32 8192, 8192
      %25 = vsyncadd [#allocation7], %s24
      %s26 = sshll.u32 [#allocation6], 4
      %s27 = int_to_ptr.vmem [resolvable:$true] %s26
      %32 = dma.hbm_to_vmem [thread:$0]  %s1, 8192, %s27, [#allocation7], 128, 128, 8
    $region9: #{tpu_custom_call.1} parent=1 // pred_fallthru
      _
    // Predicated region
    $region10: #{tpu_custom_call.1} parent=1 // pred_check
      _
    $region11: #{tpu_custom_call.1} parent=1 // pred_check_branch
      %34 = sbr.rel (0) target = $region13
    $region12: #{tpu_custom_call.1} parent=1 // pred_region
      _
    $region13: #{tpu_custom_call.1} parent=1 // pred_fallthru
      _
    // Predicated region
    $region14: #{tpu_custom_call.1} parent=1 // pred_check
      _
    $region15: #{tpu_custom_call.1} parent=1 // pred_check_branch
      %36 = sbr.rel (0) target = $region17
    $region16: #{tpu_custom_call.1} parent=1 // pred_region
      %37 = dma.done [#allocation4], 128
    $region17: #{tpu_custom_call.1} parent=1 // pred_fallthru
      _
    // Predicated region
    $region18: #{tpu_custom_call.1} parent=1 // pred_check
      _
    $region19: #{tpu_custom_call.1} parent=1 // pred_check_branch
      %39 = sbr.rel (0) target = $region21
    $region20: #{tpu_custom_call.1} parent=1 // pred_region
      %40 = dma.done [#allocation7], 8192
    $region21: #{tpu_custom_call.1} parent=1 // pred_fallthru
      _
    %41 = vst [vmem:[#allocation2] sm:$0xff] 0.0
    %v42 = vld [vmem:[#allocation3] sm:$0xff]
    %vm43 = vcmask 105472
    %44 = vst.msk [vmem:[#allocation2] sm:$0xff] %vm43, %v42
    %v45 = vld [vmem:[#allocation2] sm:$0xff]
    %v46 = vld [vmem:[#allocation6] sm:$0xff]
    %v47 = vld [vmem:[#allocation6 + $0x8] sm:$0xff]
    %v48 = vld [vmem:[#allocation6 + $0x10] sm:$0xff]
    %v49 = vld [vmem:[#allocation6 + $0x18] sm:$0xff]
    %v50 = vld [vmem:[#allocation6 + $0x20] sm:$0xff]
    %v51 = vld [vmem:[#allocation6 + $0x28] sm:$0xff]
    %v52 = vld [vmem:[#allocation6 + $0x30] sm:$0xff]
    %v53 = vld [vmem:[#allocation6 + $0x38] sm:$0xff]
    %v54 = vld [vmem:[#allocation6 + $0x40] sm:$0xff]
    %v55 = vld [vmem:[#allocation6 + $0x48] sm:$0xff]
    %v56 = vld [vmem:[#allocation6 + $0x50] sm:$0xff]
    %v57 = vld [vmem:[#allocation6 + $0x58] sm:$0xff]
    %v58 = vld [vmem:[#allocation6 + $0x60] sm:$0xff]
    %v59 = vld [vmem:[#allocation6 + $0x68] sm:$0xff]
    %v60 = vld [vmem:[#allocation6 + $0x70] sm:$0xff]
    %v61 = vld [vmem:[#allocation6 + $0x78] sm:$0xff]
    %v62 = vld [vmem:[%s2] sm:$0x1]
    %v63 = vlaneseq
    %v64 = vshrl.u32 %v63, 7
    %v65 = vsub.s32 0, %v64
    %v66 = vrot.slane %v62, %v65
    %67 = vmatprep.subr.mxu0 0.0
    %68 = vmatpush1.msra.mxu0 %v46
    %69 = vmatprep.subr.mxu0 0.0
    %70 = vmatpush1.msra.mxu0 %v47
    %71 = vmatprep.subr.mxu0 0.0
    %72 = vmatpush1.msra.mxu0 %v48
    %73 = vmatprep.subr.mxu0 0.0
    %74 = vmatpush1.msra.mxu0 %v49
    %75 = vmatprep.subr.mxu0 0.0
    %76 = vmatpush1.msra.mxu0 %v50
    %77 = vmatprep.subr.mxu0 0.0
    %78 = vmatpush1.msra.mxu0 %v51
    %79 = vmatprep.subr.mxu0 0.0
    %80 = vmatpush1.msra.mxu0 %v52
    %81 = vmatprep.subr.mxu0 0.0
    %82 = vmatpush1.msra.mxu0 %v53
    %83 = vmatprep.subr.mxu0 0.0
    %84 = vmatpush1.msra.mxu0 %v54
    %85 = vmatprep.subr.mxu0 0.0
    %86 = vmatpush1.msra.mxu0 %v55
    %87 = vmatprep.subr.mxu0 0.0
    %88 = vmatpush1.msra.mxu0 %v56
    %89 = vmatprep.subr.mxu0 0.0
    %90 = vmatpush1.msra.mxu0 %v57
    %91 = vmatprep.subr.mxu0 0.0
    %92 = vmatpush1.msra.mxu0 %v58
    %93 = vmatprep.subr.mxu0 0.0
    %94 = vmatpush1.msra.mxu0 %v59
    %95 = vmatprep.subr.mxu0 0.0
    %96 = vmatpush1.msra.mxu0 %v60
    %97 = vmatprep.subr.mxu0 0.0
    %98 = vmatpush1.msra.mxu0 %v61
    %99 = vmatprep.subr.mxu0 0.0
    %100 = vmatpush1.msra.mxu0 0.0
    %101 = vmatprep.subr.mxu0 0.0
    %102 = vmatpush1.msra.mxu0 0.0
    %103 = vmatprep.subr.mxu0 0.0
    %104 = vmatpush1.msra.mxu0 0.0
    %105 = vmatprep.subr.mxu0 0.0
    %106 = vmatpush1.msra.mxu0 0.0
    %107 = vmatprep.subr.mxu0 0.0
    %108 = vmatpush1.msra.mxu0 0.0
    %109 = vmatprep.subr.mxu0 0.0
    %110 = vmatpush1.msra.mxu0 0.0
    %111 = vmatprep.subr.mxu0 0.0
    %112 = vmatpush1.msra.mxu0 0.0
    %113 = vmatprep.subr.mxu0 0.0
    %114 = vmatpush1.msra.mxu0 0.0
    %115 = vmatprep.subr.mxu0 0.0
    %116 = vmatpush1.msra.mxu0 0.0
    %117 = vmatprep.subr.mxu0 0.0
    %118 = vmatpush1.msra.mxu0 0.0
    %119 = vmatprep.subr.mxu0 0.0
    %120 = vmatpush1.msra.mxu0 0.0
    %121 = vmatprep.subr.mxu0 0.0
    %122 = vmatpush1.msra.mxu0 0.0
    %123 = vmatprep.subr.mxu0 0.0
    %124 = vmatpush1.msra.mxu0 0.0
    %125 = vmatprep.subr.mxu0 0.0
    %126 = vmatpush1.msra.mxu0 0.0
    %127 = vmatprep.subr.mxu0 0.0
    %128 = vmatpush1.msra.mxu0 0.0
    %129 = vmatprep.subr.mxu0 0.0
    %130 = vmatpush1.msra.mxu0 0.0
    %131 = vmatprep.mubr.f32.mxu0 0.0
    %132 = vmatmul.mubr.f32.gmra.mrb[0].mxu0 %v45
    %v133 = vpop.f32.mrb[0].mxu0
    %v134 = vadd.f32 %v66, %v133
    %v135 = vpop.f32.mrb[0].mxu0
    %136 = vdwg.mxu0
    %v137 = vmax.f32 %v134, 0.0
    %s138 = scalar_lea.vmem [#allocation6], 128
    %v139 = vld [vmem:[%s138] sm:$0xff]
    %v140 = vld [vmem:[%s138 + $0x8] sm:$0xff]
    %v141 = vld [vmem:[%s138 + $0x10] sm:$0xff]
    %v142 = vld [vmem:[%s138 + $0x18] sm:$0xff]
    %v143 = vld [vmem:[%s138 + $0x20] sm:$0xff]
    %v144 = vld [vmem:[%s138 + $0x28] sm:$0xff]
    %v145 = vld [vmem:[%s138 + $0x30] sm:$0xff]
    %v146 = vld [vmem:[%s138 + $0x38] sm:$0xff]
    %v147 = vld [vmem:[%s138 + $0x40] sm:$0xff]
    %v148 = vld [vmem:[%s138 + $0x48] sm:$0xff]
    %v149 = vld [vmem:[%s138 + $0x50] sm:$0xff]
    %v150 = vld [vmem:[%s138 + $0x58] sm:$0xff]
    %v151 = vld [vmem:[%s138 + $0x60] sm:$0xff]
    %v152 = vld [vmem:[%s138 + $0x68] sm:$0xff]
    %v153 = vld [vmem:[%s138 + $0x70] sm:$0xff]
    %v154 = vld [vmem:[%s138 + $0x78] sm:$0xff]
    %v155 = vld [vmem:[%s2 + $0x1] sm:$0x1]
    %v156 = vlaneseq
    %v157 = vshrl.u32 %v156, 7
    %v158 = vsub.s32 0, %v157
    %v159 = vrot.slane %v155, %v158
    %160 = vmatprep.subr.mxu0 0.0
    %161 = vmatpush1.msra.mxu0 %v139
    %162 = vmatprep.subr.mxu0 0.0
    %163 = vmatpush1.msra.mxu0 %v140
    %164 = vmatprep.subr.mxu0 0.0
    %165 = vmatpush1.msra.mxu0 %v141
    %166 = vmatprep.subr.mxu0 0.0
    %167 = vmatpush1.msra.mxu0 %v142
    %168 = vmatprep.subr.mxu0 0.0
    %169 = vmatpush1.msra.mxu0 %v143
    %170 = vmatprep.subr.mxu0 0.0
    %171 = vmatpush1.msra.mxu0 %v144
    %172 = vmatprep.subr.mxu0 0.0
    %173 = vmatpush1.msra.mxu0 %v145
    %174 = vmatprep.subr.mxu0 0.0
    %175 = vmatpush1.msra.mxu0 %v146
    %176 = vmatprep.subr.mxu0 0.0
    %177 = vmatpush1.msra.mxu0 %v147
    %178 = vmatprep.subr.mxu0 0.0
    %179 = vmatpush1.msra.mxu0 %v148
    %180 = vmatprep.subr.mxu0 0.0
    %181 = vmatpush1.msra.mxu0 %v149
    %182 = vmatprep.subr.mxu0 0.0
    %183 = vmatpush1.msra.mxu0 %v150
    %184 = vmatprep.subr.mxu0 0.0
    %185 = vmatpush1.msra.mxu0 %v151
    %186 = vmatprep.subr.mxu0 0.0
    %187 = vmatpush1.msra.mxu0 %v152
    %188 = vmatprep.subr.mxu0 0.0
    %189 = vmatpush1.msra.mxu0 %v153
    %190 = vmatprep.subr.mxu0 0.0
    %191 = vmatpush1.msra.mxu0 %v154
    %192 = vmatprep.subr.mxu0 0.0
    %193 = vmatpush1.msra.mxu0 0.0
    %194 = vmatprep.subr.mxu0 0.0
    %195 = vmatpush1.msra.mxu0 0.0
    %196 = vmatprep.subr.mxu0 0.0
    %197 = vmatpush1.msra.mxu0 0.0
    %198 = vmatprep.subr.mxu0 0.0
    %199 = vmatpush1.msra.mxu0 0.0
    %200 = vmatprep.subr.mxu0 0.0
    %201 = vmatpush1.msra.mxu0 0.0
    %202 = vmatprep.subr.mxu0 0.0
    %203 = vmatpush1.msra.mxu0 0.0
    %204 = vmatprep.subr.mxu0 0.0
    %205 = vmatpush1.msra.mxu0 0.0
    %206 = vmatprep.subr.mxu0 0.0
    %207 = vmatpush1.msra.mxu0 0.0
    %208 = vmatprep.subr.mxu0 0.0
    %209 = vmatpush1.msra.mxu0 0.0
    %210 = vmatprep.subr.mxu0 0.0
    %211 = vmatpush1.msra.mxu0 0.0
    %212 = vmatprep.subr.mxu0 0.0
    %213 = vmatpush1.msra.mxu0 0.0
    %214 = vmatprep.subr.mxu0 0.0
    %215 = vmatpush1.msra.mxu0 0.0
    %216 = vmatprep.subr.mxu0 0.0
    %217 = vmatpush1.msra.mxu0 0.0
    %218 = vmatprep.subr.mxu0 0.0
    %219 = vmatpush1.msra.mxu0 0.0
    %220 = vmatprep.subr.mxu0 0.0
    %221 = vmatpush1.msra.mxu0 0.0
    %222 = vmatprep.subr.mxu0 0.0
    %223 = vmatpush1.msra.mxu0 0.0
    %224 = vmatprep.mubr.f32.mxu0 0.0
    %225 = vmatmul.mubr.f32.gmra.mrb[0].mxu0 %v137
    %v226 = vpop.f32.mrb[0].mxu0
    %v227 = vadd.f32 %v159, %v226
    %v228 = vpop.f32.mrb[0].mxu0
    %229 = vdwg.mxu0
    %v230 = vmax.f32 %v227, 0.0
    %s231 = scalar_lea.vmem [#allocation6], 256
    %v232 = vld [vmem:[%s231] sm:$0xff]
    %v233 = vld [vmem:[%s231 + $0x8] sm:$0xff]
    %v234 = vld [vmem:[%s231 + $0x10] sm:$0xff]
    %v235 = vld [vmem:[%s231 + $0x18] sm:$0xff]
    %v236 = vld [vmem:[%s231 + $0x20] sm:$0xff]
    %v237 = vld [vmem:[%s231 + $0x28] sm:$0xff]
    %v238 = vld [vmem:[%s231 + $0x30] sm:$0xff]
    %v239 = vld [vmem:[%s231 + $0x38] sm:$0xff]
    %v240 = vld [vmem:[%s231 + $0x40] sm:$0xff]
    %v241 = vld [vmem:[%s231 + $0x48] sm:$0xff]
    %v242 = vld [vmem:[%s231 + $0x50] sm:$0xff]
    %v243 = vld [vmem:[%s231 + $0x58] sm:$0xff]
    %v244 = vld [vmem:[%s231 + $0x60] sm:$0xff]
    %v245 = vld [vmem:[%s231 + $0x68] sm:$0xff]
    %v246 = vld [vmem:[%s231 + $0x70] sm:$0xff]
    %v247 = vld [vmem:[%s231 + $0x78] sm:$0xff]
    %v248 = vld [vmem:[%s2 + $0x2] sm:$0x1]
    %v249 = vlaneseq
    %v250 = vshrl.u32 %v249, 7
    %v251 = vsub.s32 0, %v250
    %v252 = vrot.slane %v248, %v251
    %253 = vmatprep.subr.mxu0 0.0
    %254 = vmatpush1.msra.mxu0 %v232
    %255 = vmatprep.subr.mxu0 0.0
    %256 = vmatpush1.msra.mxu0 %v233
    %257 = vmatprep.subr.mxu0 0.0
    %258 = vmatpush1.msra.mxu0 %v234
    %259 = vmatprep.subr.mxu0 0.0
    %260 = vmatpush1.msra.mxu0 %v235
    %261 = vmatprep.subr.mxu0 0.0
    %262 = vmatpush1.msra.mxu0 %v236
    %263 = vmatprep.subr.mxu0 0.0
    %264 = vmatpush1.msra.mxu0 %v237
    %265 = vmatprep.subr.mxu0 0.0
    %266 = vmatpush1.msra.mxu0 %v238
    %267 = vmatprep.subr.mxu0 0.0
    %268 = vmatpush1.msra.mxu0 %v239
    %269 = vmatprep.subr.mxu0 0.0
    %270 = vmatpush1.msra.mxu0 %v240
    %271 = vmatprep.subr.mxu0 0.0
    %272 = vmatpush1.msra.mxu0 %v241
    %273 = vmatprep.subr.mxu0 0.0
    %274 = vmatpush1.msra.mxu0 %v242
    %275 = vmatprep.subr.mxu0 0.0
    %276 = vmatpush1.msra.mxu0 %v243
    %277 = vmatprep.subr.mxu0 0.0
    %278 = vmatpush1.msra.mxu0 %v244
    %279 = vmatprep.subr.mxu0 0.0
    %280 = vmatpush1.msra.mxu0 %v245
    %281 = vmatprep.subr.mxu0 0.0
    %282 = vmatpush1.msra.mxu0 %v246
    %283 = vmatprep.subr.mxu0 0.0
    %284 = vmatpush1.msra.mxu0 %v247
    %285 = vmatprep.subr.mxu0 0.0
    %286 = vmatpush1.msra.mxu0 0.0
    %287 = vmatprep.subr.mxu0 0.0
    %288 = vmatpush1.msra.mxu0 0.0
    %289 = vmatprep.subr.mxu0 0.0
    %290 = vmatpush1.msra.mxu0 0.0
    %291 = vmatprep.subr.mxu0 0.0
    %292 = vmatpush1.msra.mxu0 0.0
    %293 = vmatprep.subr.mxu0 0.0
    %294 = vmatpush1.msra.mxu0 0.0
    %295 = vmatprep.subr.mxu0 0.0
    %296 = vmatpush1.msra.mxu0 0.0
    %297 = vmatprep.subr.mxu0 0.0
    %298 = vmatpush1.msra.mxu0 0.0
    %299 = vmatprep.subr.mxu0 0.0
    %300 = vmatpush1.msra.mxu0 0.0
    %301 = vmatprep.subr.mxu0 0.0
    %302 = vmatpush1.msra.mxu0 0.0
    %303 = vmatprep.subr.mxu0 0.0
    %304 = vmatpush1.msra.mxu0 0.0
    %305 = vmatprep.subr.mxu0 0.0
    %306 = vmatpush1.msra.mxu0 0.0
    %307 = vmatprep.subr.mxu0 0.0
    %308 = vmatpush1.msra.mxu0 0.0
    %309 = vmatprep.subr.mxu0 0.0
    %310 = vmatpush1.msra.mxu0 0.0
    %311 = vmatprep.subr.mxu0 0.0
    %312 = vmatpush1.msra.mxu0 0.0
    %313 = vmatprep.subr.mxu0 0.0
    %314 = vmatpush1.msra.mxu0 0.0
    %315 = vmatprep.subr.mxu0 0.0
    %316 = vmatpush1.msra.mxu0 0.0
    %317 = vmatprep.mubr.f32.mxu0 0.0
    %318 = vmatmul.mubr.f32.gmra.mrb[0].mxu0 %v230
    %v319 = vpop.f32.mrb[0].mxu0
    %v320 = vadd.f32 %v252, %v319
    %v321 = vpop.f32.mrb[0].mxu0
    %322 = vdwg.mxu0
    %v323 = vmax.f32 %v320, 0.0
    %s324 = scalar_lea.vmem [#allocation6], 384
    %v325 = vld [vmem:[%s324] sm:$0xff]
    %v326 = vld [vmem:[%s324 + $0x8] sm:$0xff]
    %v327 = vld [vmem:[%s324 + $0x10] sm:$0xff]
    %v328 = vld [vmem:[%s324 + $0x18] sm:$0xff]
    %v329 = vld [vmem:[%s324 + $0x20] sm:$0xff]
    %v330 = vld [vmem:[%s324 + $0x28] sm:$0xff]
    %v331 = vld [vmem:[%s324 + $0x30] sm:$0xff]
    %v332 = vld [vmem:[%s324 + $0x38] sm:$0xff]
    %v333 = vld [vmem:[%s324 + $0x40] sm:$0xff]
    %v334 = vld [vmem:[%s324 + $0x48] sm:$0xff]
    %v335 = vld [vmem:[%s324 + $0x50] sm:$0xff]
    %v336 = vld [vmem:[%s324 + $0x58] sm:$0xff]
    %v337 = vld [vmem:[%s324 + $0x60] sm:$0xff]
    %v338 = vld [vmem:[%s324 + $0x68] sm:$0xff]
    %v339 = vld [vmem:[%s324 + $0x70] sm:$0xff]
    %v340 = vld [vmem:[%s324 + $0x78] sm:$0xff]
    %v341 = vld [vmem:[%s2 + $0x3] sm:$0x1]
    %v342 = vlaneseq
    %v343 = vshrl.u32 %v342, 7
    %v344 = vsub.s32 0, %v343
    %v345 = vrot.slane %v341, %v344
    %346 = vmatprep.subr.mxu0 0.0
    %347 = vmatpush1.msra.mxu0 %v325
    %348 = vmatprep.subr.mxu0 0.0
    %349 = vmatpush1.msra.mxu0 %v326
    %350 = vmatprep.subr.mxu0 0.0
    %351 = vmatpush1.msra.mxu0 %v327
    %352 = vmatprep.subr.mxu0 0.0
    %353 = vmatpush1.msra.mxu0 %v328
    %354 = vmatprep.subr.mxu0 0.0
    %355 = vmatpush1.msra.mxu0 %v329
    %356 = vmatprep.subr.mxu0 0.0
    %357 = vmatpush1.msra.mxu0 %v330
    %358 = vmatprep.subr.mxu0 0.0
    %359 = vmatpush1.msra.mxu0 %v331
    %360 = vmatprep.subr.mxu0 0.0
    %361 = vmatpush1.msra.mxu0 %v332
    %362 = vmatprep.subr.mxu0 0.0
    %363 = vmatpush1.msra.mxu0 %v333
    %364 = vmatprep.subr.mxu0 0.0
    %365 = vmatpush1.msra.mxu0 %v334
    %366 = vmatprep.subr.mxu0 0.0
    %367 = vmatpush1.msra.mxu0 %v335
    %368 = vmatprep.subr.mxu0 0.0
    %369 = vmatpush1.msra.mxu0 %v336
    %370 = vmatprep.subr.mxu0 0.0
    %371 = vmatpush1.msra.mxu0 %v337
    %372 = vmatprep.subr.mxu0 0.0
    %373 = vmatpush1.msra.mxu0 %v338
    %374 = vmatprep.subr.mxu0 0.0
    %375 = vmatpush1.msra.mxu0 %v339
    %376 = vmatprep.subr.mxu0 0.0
    %377 = vmatpush1.msra.mxu0 %v340
    %378 = vmatprep.subr.mxu0 0.0
    %379 = vmatpush1.msra.mxu0 0.0
    %380 = vmatprep.subr.mxu0 0.0
    %381 = vmatpush1.msra.mxu0 0.0
    %382 = vmatprep.subr.mxu0 0.0
    %383 = vmatpush1.msra.mxu0 0.0
    %384 = vmatprep.subr.mxu0 0.0
    %385 = vmatpush1.msra.mxu0 0.0
    %386 = vmatprep.subr.mxu0 0.0
    %387 = vmatpush1.msra.mxu0 0.0
    %388 = vmatprep.subr.mxu0 0.0
    %389 = vmatpush1.msra.mxu0 0.0
    %390 = vmatprep.subr.mxu0 0.0
    %391 = vmatpush1.msra.mxu0 0.0
    %392 = vmatprep.subr.mxu0 0.0
    %393 = vmatpush1.msra.mxu0 0.0
    %394 = vmatprep.subr.mxu0 0.0
    %395 = vmatpush1.msra.mxu0 0.0
    %396 = vmatprep.subr.mxu0 0.0
    %397 = vmatpush1.msra.mxu0 0.0
    %398 = vmatprep.subr.mxu0 0.0
    %399 = vmatpush1.msra.mxu0 0.0
    %400 = vmatprep.subr.mxu0 0.0
    %401 = vmatpush1.msra.mxu0 0.0
    %402 = vmatprep.subr.mxu0 0.0
    %403 = vmatpush1.msra.mxu0 0.0
    %404 = vmatprep.subr.mxu0 0.0
    %405 = vmatpush1.msra.mxu0 0.0
    %406 = vmatprep.subr.mxu0 0.0
    %407 = vmatpush1.msra.mxu0 0.0
    %408 = vmatprep.subr.mxu0 0.0
    %409 = vmatpush1.msra.mxu0 0.0
    %410 = vmatprep.mubr.f32.mxu0 0.0
    %411 = vmatmul.mubr.f32.gmra.mrb[0].mxu0 %v323
    %v412 = vpop.f32.mrb[0].mxu0
    %v413 = vadd.f32 %v345, %v412
    %v414 = vpop.f32.mrb[0].mxu0
    %415 = vdwg.mxu0
    %v416 = vlaneseq
    %v417 = vand.u32 %v416, 127
    %vm418 = vcmp.lt.s32.totalorder %v417, 3
    %v419 = vsel %vm418, %v413, -inf
    %vm420 = vcmask 64512
    %v421 = vsel %vm420, %v419, -inf
    %422 = vmax.xlane.f32.xlu0 %v421
    %v423 = vpop.xlane.xlu0 %422
    %v424 = vsub.f32 %v419, %v423
    %v425 = vmul.f32 %v424, 1.442695
    %v426 = vpow.pop %v425
    %v427 = vsel %vm420, %v426, 0.0
    %428 = vadd.xlane.f32.xlu0 %v427
    %v429 = vpop.xlane.xlu0 %428
    %v430 = vrcp.pop %v429
    %v431 = vmul.f32 %v426, %v430
    %432 = vst.msk [vmem:[#allocation8] sm:$0xff] %vm420, %v431
    // Predicated region
    $region22: #{tpu_custom_call.1} parent=1 // pred_check
      _
    $region23: #{tpu_custom_call.1} parent=1 // pred_check_branch
      %434 = sbr.rel (0) target = $region25
    $region24: #{tpu_custom_call.1} parent=1 // pred_region
      %s436 = ssub.s32 128, 128
      %437 = vsyncadd [#allocation5], %s436
      %s439 = sshll.u32 [#allocation8], 4
      %s440 = int_to_ptr.vmem [resolvable:$true] %s439
      %442 = dma.vmem_to_hbm [thread:$0]  %s440, 128, %s3, [#allocation5]
    $region25: #{tpu_custom_call.1} parent=1 // pred_fallthru
      _
    // Predicated region
    $region26: #{tpu_custom_call.1} parent=1 // pred_check
      _
    $region27: #{tpu_custom_call.1} parent=1 // pred_check_branch
      %444 = sbr.rel (0) target = $region29
    $region28: #{tpu_custom_call.1} parent=1 // pred_region
      %445 = dma.done [#allocation5], 128
    $region29: #{tpu_custom_call.1} parent=1 // pred_fallthru
      _
    %446 = vsyncpa [#allocation4], 1
    %447 = vsyncpa [#allocation7], 1
    %448 = vsyncpa [#allocation5], 1

</llo_original>
